<compile_context>
chip_gen: v7x
topology: tpu7x:2x2x1
jax: 0.10.0
libtpu: 0.0.40
codegen_flags: <defaults>
</compile_context>

<pallas_src>
import numpy as np
import jax
import jax.numpy as jnp
from jax.experimental import pallas as pl
from jax.experimental.pallas import tpu as pltpu


def dct_matrix(blocksize: int) -> np.ndarray:
    """Orthonormal DCT-II matrix A[i, n] = sqrt(2/B) * c_i * cos((2n+1) i pi / (2B))."""
    B = blocksize
    n = np.arange(B)
    A = np.sqrt(2.0 / B) * np.cos((2 * n[None, :] + 1) * n[:, None] * np.pi / (2 * B))
    A[0, :] *= 1.0 / np.sqrt(2.0)
    return A.astype(np.float32)


def _block_dct_matrix(tile: int, blocksize: int) -> np.ndarray:
    """kron(I_{tile/blocksize}, A): blockwise 1-D DCT applied to a `tile`-wide axis."""
    A = dct_matrix(blocksize)
    return np.kron(np.eye(tile // blocksize, dtype=np.float32), A).astype(np.float32)


def _largest_divisor(n: int, cap: int, step: int = 1) -> int:
    """Largest multiple of `step` that divides n and is <= cap (assumes step divides n)."""
    best = step
    d = step
    while d <= min(n, cap):
        if n % d == 0:
            best = d
        d += step
    return best


def _make_dct_l1_partial_kernel(km: int, tw: int):
    """Kernel over one (km, TI, TW) slab: writes sum|DCT(p - r)| broadcast to an (8,128) block."""

    def kernel(dti_ref, dtwt_ref, p_ref, r_ref, out_ref):
        dti = dti_ref[...]     # (TI, TI) bf16; constant index_map -> fetched once
        dtwt = dtwt_ref[...]   # (TW, TW) bf16

        def body(k, acc):
            # Subtract at native precision, then cast the diff to bf16 for the fast MXU path.
            d = (p_ref[k] - r_ref[k]).astype(jnp.bfloat16)                  # (TI, TW)
            c = jnp.dot(dti, d, preferred_element_type=jnp.float32)         # row (H) DCT
            c = jnp.dot(c.astype(jnp.bfloat16), dtwt,
                        preferred_element_type=jnp.float32)                 # col (W) DCT
            # Defer the cross-lane collapse: accumulate a (1, TW) row per sub-tile.
            return acc + jnp.sum(jnp.abs(c), axis=0, keepdims=True)

        acc = jax.lax.fori_loop(0, km, body, jnp.zeros((1, tw), jnp.float32),
                                unroll=min(km, 8))
        # Single XLU lane-collapse per grid step; lane-dense partial-sum output block.
        out_ref[...] = jnp.broadcast_to(jnp.sum(acc), out_ref.shape)

    return kernel


def dct_loss(pred: jnp.ndarray, real: jnp.ndarray, blocksize: int = 8, *,
             max_row_tile: int = 128, col_tile=None,
             max_block_bytes: int = 4 << 20) -> jnp.ndarray:
    """Pallas implementation of DCTLoss.forward (metric = L1Loss)."""
    N, C, H, W = pred.shape
    assert real.shape == pred.shape
    assert C == 1, "DCT loss is only implemented for a single channel"
    B = blocksize
    assert H % B == 0 and W % B == 0

    # Images stacked along rows: (N, H, W) -> (N*H, W).  8-blocks never straddle images.
    M = N * H

    # --- row tile: multiple of B, <= max_row_tile -> left-DCT overcompute capped at TI/B. ----
    TI = _largest_divisor(M, max(max_row_tile, B), B)

    # --- column tile / padding: prefer lane-aligned TW=128 (16x right-DCT overcompute, 32 KiB
    #     bf16 D matrix) over anything wider; use full width only when W <= 128; otherwise
    #     zero-pad W up to a multiple of 128 (padded all-zero blocks contribute 0 to the sum).
    pad_cols = 0
    if col_tile is not None:
        TW = int(col_tile)
        assert W % TW == 0 and TW % B == 0 and (TW == W or TW % 128 == 0)
    elif W % 128 == 0 and 128 % B == 0:
        TW = 128
    elif W <= 128:
        TW = W
    elif 128 % B == 0:
        pad_cols = (-W) % 128
        TW = 128
    else:
        TW = W  # TODO(synk): blocksizes that do not divide 128 fall back to a full-width DCT.
    W_eff = W + pad_cols

    # --- sub-tiles per grid step: ~max_block_bytes of input per step amortizes the
    #     ~0.35 us/step pipeline overhead; 2 inputs x 2 buffers stays under vmem_limit_bytes.
    G = M // TI
    itemsize = jnp.dtype(pred.dtype).itemsize
    km_cap = max(1, max_block_bytes // (TI * TW * itemsize))
    KM = _largest_divisor(G, km_cap, 1)
    GM = G // KM
    GW = W_eff // TW

    # --- make sure the (fully parallel) grid has >= 2 steps so both v7x TensorCores get work.
    if GM * GW < 2:
        if KM > 1:
            KM = KM // 2 if KM % 2 == 0 else 1
            GM = G // KM
        elif TI > B and TI % (2 * B) == 0 and M % (TI // 2) == 0:
            TI //= 2
            G = M // TI
            GM = G  # KM stays 1

    # bf16 DCT matrices (single-pass MXU operands; tiny VMEM even double-buffered).
    D_TI = jnp.asarray(_block_dct_matrix(TI, B), dtype=jnp.bfloat16)        # (TI, TI)
    D_TW_T = jnp.asarray(_block_dct_matrix(TW, B).T, dtype=jnp.bfloat16)    # (TW, TW)

    # Free reshapes, no wrapper-side dtype cast (diff is cast to bf16 inside the kernel).
    p2 = pred[:, 0]
    r2 = real[:, 0]
    if pad_cols:
        p2 = jnp.pad(p2, ((0, 0), (0, 0), (0, pad_cols)))
        r2 = jnp.pad(r2, ((0, 0), (0, 0), (0, pad_cols)))
    p3 = p2.reshape(G, TI, W_eff)
    r3 = r2.reshape(G, TI, W_eff)

    partials = pl.pallas_call(
        _make_dct_l1_partial_kernel(KM, TW),
        out_shape=jax.ShapeDtypeStruct((GM * GW, 8, 128), jnp.float32),
        grid_spec=pltpu.PrefetchScalarGridSpec(
            num_scalar_prefetch=0,
            grid=(GM, GW),
            in_specs=[
                pl.BlockSpec((TI, TI), lambda i, j: (0, 0)),
                pl.BlockSpec((TW, TW), lambda i, j: (0, 0)),
                pl.BlockSpec((KM, TI, TW), lambda i, j: (i, 0, j)),
                pl.BlockSpec((KM, TI, TW), lambda i, j: (i, 0, j)),
            ],
            out_specs=pl.BlockSpec((1, 8, 128), lambda i, j: (i * GW + j, 0, 0)),
        ),
        compiler_params=pltpu.CompilerParams(
            dimension_semantics=("parallel", "parallel"),
            vmem_limit_bytes=32 * 1024 * 1024),
    )(D_TI, D_TW_T, p3, r3)

    total = jnp.sum(partials[:, 0, 0])
    # L1Loss = mean over all N*H*W coefficients (zero-padded columns add 0 to the sum);
    # .mean(0) on the scalar loss is a no-op.
    return total / jnp.float32(N * H * W)


def dct_loss_ref(pred: jnp.ndarray, real: jnp.ndarray, blocksize: int = 8) -> jnp.ndarray:
    """Pure-JAX f32 reference mirroring the per-block PyTorch formulation."""
    N, C, H, W = pred.shape
    B = blocksize
    A = jnp.asarray(dct_matrix(B))

    def coeffs(x):
        xb = x[:, 0].reshape(N, H // B, B, W // B, B).transpose(0, 1, 3, 2, 4)
        return jnp.einsum('ij,nhwjk,lk->nhwil', A, xb, A)

    return jnp.mean(jnp.abs(coeffs(pred) - coeffs(real)))


if __name__ == "__main__":
    key = jax.random.PRNGKey(0)
    # bf16 MXU operands (f32 accumulation) -> loosened relative tolerance vs the f32 reference.
    RTOL, ATOL = 1e-2, 1e-4

    # 1) Canonical small shape.  The grid-split logic forces a (2, 1) parallel grid here so
    #    both v7x TensorCores get work even on a tiny input.
    k1, k2 = jax.random.split(jax.random.fold_in(key, 0))
    pred = jax.random.normal(k1, (2, 1, 16, 16), dtype=jnp.float32)
    real = jax.random.normal(k2, (2, 1, 16, 16), dtype=jnp.float32)
    loss = jax.block_until_ready(dct_loss(pred, real, blocksize=8))
    ref = jax.block_until_ready(dct_loss_ref(pred, real, blocksize=8))
    np.testing.assert_allclose(np.asarray(loss), np.asarray(ref), rtol=RTOL, atol=ATOL)

    # 2) Forced small tiles -> exercises the multi-block fully-parallel (4, 2) grid with
    #    lane-aligned TW=128 and per-step partial-sum outputs.
    k3, k4 = jax.random.split(jax.random.fold_in(key, 1))
    pred2 = jax.random.normal(k3, (2, 1, 64, 256), dtype=jnp.float32)
    real2 = jax.random.normal(k4, (2, 1, 64, 256), dtype=jnp.float32)
    loss2 = jax.block_until_ready(
        dct_loss(pred2, real2, blocksize=8,
                 max_row_tile=32, col_tile=128, max_block_bytes=32 * 128 * 4))
    ref2 = jax.block_until_ready(dct_loss_ref(pred2, real2, blocksize=8))
    np.testing.assert_allclose(np.asarray(loss2), np.asarray(ref2), rtol=RTOL, atol=ATOL)

    # 3) Default tiling on a larger image -> exercises KM > 1 (multiple sub-tiles per grid
    #    step, fori_loop with dynamic first-axis ref indexing) and TW=128 selection.
    k5, k6 = jax.random.split(jax.random.fold_in(key, 2))
    pred3 = jax.random.normal(k5, (4, 1, 128, 256), dtype=jnp.float32)
    real3 = jax.random.normal(k6, (4, 1, 128, 256), dtype=jnp.float32)
    loss3 = jax.block_until_ready(dct_loss(pred3, real3, blocksize=8))
    ref3 = jax.block_until_ready(dct_loss_ref(pred3, real3, blocksize=8))
    np.testing.assert_allclose(np.asarray(loss3), np.asarray(ref3), rtol=RTOL, atol=ATOL)

    print("KERNEL_OK")
</pallas_src>

<mosaic_0001>
module attributes {stable_mosaic.version = 11 : i64} {
  func.func @kernel(%arg0: i32, %arg1: i32, %arg2: memref<16x16xbf16, #tpu.memory_space<vmem>>, %arg3: memref<16x16xbf16, #tpu.memory_space<vmem>>, %arg4: memref<1x16x16xf32, #tpu.memory_space<vmem>>, %arg5: memref<1x16x16xf32, #tpu.memory_space<vmem>>, %arg6: memref<1x8x128xf32, #tpu.memory_space<vmem>>) attributes {dimension_semantics = [#tpu.dimension_semantics<parallel>, #tpu.dimension_semantics<parallel>], iteration_bounds = array<i64: 2, 1>, scalar_prefetch = 0 : i64, scratch_operands = 0 : i64, tpu.core_type = #tpu.core_type<tc>, window_params = [{pipeline_mode = #tpu.pipeline_mode<synchronous>, transform_indices = @transform_0, window_bounds = array<i64: 16, 16>}, {pipeline_mode = #tpu.pipeline_mode<synchronous>, transform_indices = @transform_1, window_bounds = array<i64: 16, 16>}, {transform_indices = @transform_2, window_bounds = array<i64: 1, 16, 16>}, {transform_indices = @transform_3, window_bounds = array<i64: 1, 16, 16>}, {transform_indices = @transform_4, window_bounds = array<i64: 1, 8, 128>}]} {
    %c0 = arith.constant 0 : index
    %c0_0 = arith.constant 0 : index
    %0 = vector.load %arg2[%c0, %c0_0] : memref<16x16xbf16, #tpu.memory_space<vmem>>, vector<16x16xbf16>
    %c0_1 = arith.constant 0 : index
    %c0_2 = arith.constant 0 : index
    %1 = vector.load %arg3[%c0_1, %c0_2] : memref<16x16xbf16, #tpu.memory_space<vmem>>, vector<16x16xbf16>
    %cst = arith.constant 0.000000e+00 : f32
    %2 = vector.broadcast %cst : f32 to vector<1x16xf32>
    %c0_i32 = arith.constant 0 : i32
    %3 = arith.index_cast %c0_i32 : i32 to index
    %c0_3 = arith.constant 0 : index
    %c0_4 = arith.constant 0 : index
    %4 = vector.load %arg4[%3, %c0_3, %c0_4] : memref<1x16x16xf32, #tpu.memory_space<vmem>>, vector<1x16x16xf32>
    %5 = vector.shape_cast %4 : vector<1x16x16xf32> to vector<16x16xf32>
    %6 = arith.index_cast %c0_i32 : i32 to index
    %c0_5 = arith.constant 0 : index
    %c0_6 = arith.constant 0 : index
    %7 = vector.load %arg5[%6, %c0_5, %c0_6] : memref<1x16x16xf32, #tpu.memory_space<vmem>>, vector<1x16x16xf32>
    %8 = vector.shape_cast %7 : vector<1x16x16xf32> to vector<16x16xf32>
    %9 = arith.subf %5, %8 : vector<16x16xf32>
    %10 = arith.truncf %9 : vector<16x16xf32> to vector<16x16xbf16>
    %cst_7 = arith.constant dense<0.000000e+00> : vector<16x16xf32>
    %11 = tpu.matmul %0, %10, %cst_7 {dimension_numbers = #tpu.dot_dimension_numbers<[1], [0], [0], [1], [0, 0, 1, 1], [], []>} : vector<16x16xbf16>, vector<16x16xbf16>, vector<16x16xf32> -> vector<16x16xf32>
    %12 = arith.truncf %11 : vector<16x16xf32> to vector<16x16xbf16>
    %cst_8 = arith.constant dense<0.000000e+00> : vector<16x16xf32>
    %13 = tpu.matmul %12, %1, %cst_8 {dimension_numbers = #tpu.dot_dimension_numbers<[1], [0], [0], [1], [0, 0, 1, 1], [], []>} : vector<16x16xbf16>, vector<16x16xbf16>, vector<16x16xf32> -> vector<16x16xf32>
    %14 = math.absf %13 : vector<16x16xf32>
    %cst_9 = arith.constant dense<0.000000e+00> : vector<16xf32>
    %15 = vector.multi_reduction <add>, %14, %cst_9 [0] : vector<16x16xf32> to vector<16xf32>
    %16 = vector.shape_cast %15 : vector<16xf32> to vector<1x16xf32>
    %17 = arith.addf %2, %16 : vector<1x16xf32>
    %c1_i32 = arith.constant 1 : i32
    %18 = vector.shape_cast %17 : vector<1x16xf32> to vector<1x1x16xf32>
    %cst_10 = arith.constant dense<0.000000e+00> : vector<1xf32>
    %19 = vector.multi_reduction <add>, %18, %cst_10 [1, 2] : vector<1x1x16xf32> to vector<1xf32>
    %20 = vector.shape_cast %19 : vector<1xf32> to vector<1x1x1xf32>
    %21 = vector.extract %20[0, 0, 0] : f32 from vector<1x1x1xf32>
    %22 = vector.broadcast %21 : f32 to vector<1x8x128xf32>
    %c0_11 = arith.constant 0 : index
    %c0_12 = arith.constant 0 : index
    %c0_13 = arith.constant 0 : index
    %23 = vector.load %arg6[%c0_11, %c0_12, %c0_13] : memref<1x8x128xf32, #tpu.memory_space<vmem>>, vector<1x8x128xf32>
    tpu.vector_store %arg6[%c0_11, %c0_12, %c0_13], %22 {strides = array<i32>} : memref<1x8x128xf32, #tpu.memory_space<vmem>>, vector<1x8x128xf32>,
    return
  }
  func.func @transform_0(%arg0: i32, %arg1: i32) -> (i32, i32) {
    %c0_i32 = arith.constant 0 : i32
    %c0_i32_0 = arith.constant 0 : i32
    %c0_i32_1 = arith.constant 0 : i32
    return %c0_i32, %c0_i32_0 : i32, i32
  }
  func.func @transform_1(%arg0: i32, %arg1: i32) -> (i32, i32) {
    %c0_i32 = arith.constant 0 : i32
    %c0_i32_0 = arith.constant 0 : i32
    %c0_i32_1 = arith.constant 0 : i32
    return %c0_i32, %c0_i32_0 : i32, i32
  }
  func.func @transform_2(%arg0: i32, %arg1: i32) -> (i32, i32, i32) {
    %c0_i32 = arith.constant 0 : i32
    %c0_i32_0 = arith.constant 0 : i32
    return %arg0, %c0_i32, %arg1 : i32, i32, i32
  }
  func.func @transform_3(%arg0: i32, %arg1: i32) -> (i32, i32, i32) {
    %c0_i32 = arith.constant 0 : i32
    %c0_i32_0 = arith.constant 0 : i32
    return %arg0, %c0_i32, %arg1 : i32, i32, i32
  }
  func.func @transform_4(%arg0: i32, %arg1: i32) -> (i32, i32, i32) {
    %c1_i32 = arith.constant 1 : i32
    %0 = arith.muli %arg0, %c1_i32 : i32
    %1 = arith.addi %0, %arg1 : i32
    %c0_i32 = arith.constant 0 : i32
    %c0_i32_0 = arith.constant 0 : i32
    %c0_i32_1 = arith.constant 0 : i32
    return %1, %c0_i32, %c0_i32_0 : i32, i32, i32
  }
}

</mosaic_0001>

<llo_original>
// kernel: tpu_custom_call.1
$region0: #{tpu_custom_call.1}
  #allocation0 [shape = 'u32[]', space=smem, size = 0x4, offset = 0x4, fixed_abs, tag = 'smem constant byte address 0x4 - core index']
  #allocation1 [shape = 'u32[144,128]{1,0:T(1,128)}', space=vmem, size = 0x12000, scoped, tag = 'internal scratch']
  %s0 = inlined_call_operand.hbm [shape: bf16[16,16], index: 0, kind: input, shape index: {}]
  %s1 = inlined_call_operand.hbm [shape: bf16[16,16], index: 1, kind: input, shape index: {}]
  %s2 = inlined_call_operand.hbm [shape: f32[2,16,16], index: 2, kind: input, shape index: {}]
  %s3 = inlined_call_operand.hbm [shape: f32[2,16,16], index: 3, kind: input, shape index: {}]
  %s4 = inlined_call_operand.hbm [shape: f32[2,8,128], index: 4, kind: output, shape index: {}]
  %s5 = sld [smem:[#allocation0]]
  $region65: #{tpu_custom_call.1} parent=0
    _
  %s7 = ssub.s32 1, %s5
  %s8 = scalar_select 0, %s7, %s5
  $region1: #{tpu_custom_call.1} parent=0
    #allocation2 [shape = 'u8[4096]{0}', space=vmem, size = 0x1000, scoped, tag = 'input window, operand 0, single buffered']
    #allocation3 [shape = 's32[2]{0}', space=sflag, size = 0x8, scoped, tag = 'scoped memory for tpu_custom_call.1']
    #allocation4 [shape = 's32[2]{0}', space=sflag, size = 0x8, scoped, tag = 'scoped memory for tpu_custom_call.1']
    #allocation5 [shape = 'u8[4096]{0}', space=vmem, size = 0x1000, scoped, tag = 'input window, operand 1, single buffered']
    #allocation6 [shape = 's32[1]{0}', space=sflag, size = 0x4, scoped, tag = 'scoped memory for tpu_custom_call.1']
    #allocation7 [shape = 'u8[16384]{0}', space=vmem, size = 0x4000, scoped, tag = 'input window, operand 2']
    #allocation8 [shape = 'u8[16384]{0}', space=vmem, size = 0x4000, scoped, tag = 'input window, operand 3']
    #allocation9 [shape = 'u8[8192]{0}', space=vmem, size = 0x2000, scoped, tag = 'output window, operand 0']
    %9 = vsyncpa [#allocation3], 0
    %10 = vsyncpa [#allocation6], 0
    %11 = vsyncpa [#allocation4], 0
    %s12 = scalar_lea.sflag [#allocation4], 1
    %13 = vsyncpa %s12, 0
    loop: start=0, step=1, limit=4
    $region2: #{tpu_custom_call.1} parent=1 // loop_pre_header
      _
    $region3: #{tpu_custom_call.1} parent=1 // loop_header
      %s15 = sphi 0, %s19
      %p16 = scmp.ge.s32.totalorder %s15, 4
      %s22 = sphi 0, %s34
      %s23 = sphi 0, %s30
      %s24 = sphi 0, %s22
      %s25 = sphi 0, %s23
      %s26 = sphi 0, %s24
      %s27 = sphi 0, %s25
      %s35 = sphi 0, %s35
      %s37 = sphi 0, %s35
      %s38 = sphi 0, %s37
      %s52 = sphi 0, %s38
      %s56 = sphi 0, %s56
      %s58 = sphi 0, %s56
      %s59 = sphi 0, %s58
      %s73 = sphi 0, %s59
      %s81 = sphi 0, %s83
      %s84 = sphi 0, %s81
      %s85 = sphi 0, %s84
      %s101 = sphi 0, %s85
      %s109 = sphi 0, %s111
      %s112 = sphi 0, %s109
      %s113 = sphi 0, %s112
      %s129 = sphi 0, %s113
      %s137 = sphi 0, %s139
      %s140 = sphi 0, %s137
      %s141 = sphi 0, %s140
      %s157 = sphi 0, %s141
    $region4: #{tpu_custom_call.1} parent=1 // loop_header_branch
      %18 = sbr.rel (%p16) target = $region8
    $region5: #{tpu_custom_call.1} parent=1 // loop_body
      %s20 = ssub.s32 %s15, 1
      %s21 = ssub.s32 %s15, 2
      %s28 = sadd.s32 1, %s23
      %p29 = scmp.ge.s32.totalorder %s28, 1
      %s30 = scalar_select %p29, 0, %s28
      %s31 = sadd.s32 1, %s22
      %s32 = scalar_select %p29, %s31, %s22
      %p33 = scmp.ge.s32.totalorder %s32, 2
      %s34 = scalar_select %p33, 0, %s32
      %s36 = sadd.s32 %s35, 1
      %p39 = scmp.eq.s32.totalorder %s15, 1
      %p40 = scmp.ne.s32.totalorder %s35, %s37
      %p41 = scmp.eq.s32.totalorder %s15, 0
      %p42 = por %p40, %p41
      %p43 = scmp.ne.s32.totalorder %s35, %s37
      %p44 = scmp.eq.s32.totalorder %s20, 1
      %p45 = por %p43, %p44
      %p46 = scmp.ne.s32.totalorder %s37, %s38
      %p47 = scmp.eq.s32.totalorder %s20, 0
      %p48 = por %p46, %p47
      %p49 = scmp.ne.s32.totalorder %s37, %s38
      %p50 = scmp.eq.s32.totalorder %s21, 1
      %p51 = por %p49, %p50
      %p53 = scmp.ne.s32.totalorder %s38, %s52
      %p54 = scmp.eq.s32.totalorder %s21, 0
      %p55 = por %p53, %p54
      %s57 = sadd.s32 %s56, 1
      %p60 = scmp.eq.s32.totalorder %s15, 1
      %p61 = scmp.ne.s32.totalorder %s56, %s58
      %p62 = scmp.eq.s32.totalorder %s15, 0
      %p63 = por %p61, %p62
      %p64 = scmp.ne.s32.totalorder %s56, %s58
      %p65 = scmp.eq.s32.totalorder %s20, 1
      %p66 = por %p64, %p65
      %p67 = scmp.ne.s32.totalorder %s58, %s59
      %p68 = scmp.eq.s32.totalorder %s20, 0
      %p69 = por %p67, %p68
      %p70 = scmp.ne.s32.totalorder %s58, %s59
      %p71 = scmp.eq.s32.totalorder %s21, 1
      %p72 = por %p70, %p71
      %p74 = scmp.ne.s32.totalorder %s59, %s73
      %p75 = scmp.eq.s32.totalorder %s21, 0
      %p76 = por %p74, %p75
      %s77 = ssub.s32 %s22, %s34
      %s78 = ssub.s32 %s23, %s30
      %s79 = sor.u32 %s77, %s78
      %p80 = scmp.eq.s32.totalorder %s79, 0
      %s82 = sadd.s32 %s81, 1
      %s83 = scalar_select %p80, %s81, %s82
      %p86 = pneg %p80
      %p87 = scmp.eq.s32.totalorder %s15, 1
      %p88 = por %p86, %p87
      %p89 = scmp.ne.s32.totalorder %s81, %s84
      %p90 = scmp.eq.s32.totalorder %s15, 0
      %p91 = por %p89, %p90
      %p92 = scmp.ne.s32.totalorder %s81, %s84
      %p93 = scmp.eq.s32.totalorder %s20, 1
      %p94 = por %p92, %p93
      %p95 = scmp.ne.s32.totalorder %s84, %s85
      %p96 = scmp.eq.s32.totalorder %s20, 0
      %p97 = por %p95, %p96
      %p98 = scmp.ne.s32.totalorder %s84, %s85
      %p99 = scmp.eq.s32.totalorder %s21, 1
      %p100 = por %p98, %p99
      %p102 = scmp.ne.s32.totalorder %s85, %s101
      %p103 = scmp.eq.s32.totalorder %s21, 0
      %p104 = por %p102, %p103
      %s105 = ssub.s32 %s22, %s34
      %s106 = ssub.s32 %s23, %s30
      %s107 = sor.u32 %s105, %s106
      %p108 = scmp.eq.s32.totalorder %s107, 0
      %s110 = sadd.s32 %s109, 1
      %s111 = scalar_select %p108, %s109, %s110
      %p114 = pneg %p108
      %p115 = scmp.eq.s32.totalorder %s15, 1
      %p116 = por %p114, %p115
      %p117 = scmp.ne.s32.totalorder %s109, %s112
      %p118 = scmp.eq.s32.totalorder %s15, 0
      %p119 = por %p117, %p118
      %p120 = scmp.ne.s32.totalorder %s109, %s112
      %p121 = scmp.eq.s32.totalorder %s20, 1
      %p122 = por %p120, %p121
      %p123 = scmp.ne.s32.totalorder %s112, %s113
      %p124 = scmp.eq.s32.totalorder %s20, 0
      %p125 = por %p123, %p124
      %p126 = scmp.ne.s32.totalorder %s112, %s113
      %p127 = scmp.eq.s32.totalorder %s21, 1
      %p128 = por %p126, %p127
      %p130 = scmp.ne.s32.totalorder %s113, %s129
      %p131 = scmp.eq.s32.totalorder %s21, 0
      %p132 = por %p130, %p131
      %s133 = sadd.s32 %s22, %s23
      %s134 = sadd.s32 %s34, %s30
      %s135 = ssub.s32 %s133, %s134
      %p136 = scmp.eq.s32.totalorder %s135, 0
      %s138 = sadd.s32 %s137, 1
      %s139 = scalar_select %p136, %s137, %s138
      %p142 = pneg %p136
      %p143 = scmp.eq.s32.totalorder %s15, 1
      %p144 = por %p142, %p143
      %p145 = scmp.ne.s32.totalorder %s137, %s140
      %p146 = scmp.eq.s32.totalorder %s15, 0
      %p147 = por %p145, %p146
      %p148 = scmp.ne.s32.totalorder %s137, %s140
      %p149 = scmp.eq.s32.totalorder %s20, 1
      %p150 = por %p148, %p149
      %p151 = scmp.ne.s32.totalorder %s140, %s141
      %p152 = scmp.eq.s32.totalorder %s20, 0
      %p153 = por %p151, %p152
      %p154 = scmp.ne.s32.totalorder %s140, %s141
      %p155 = scmp.eq.s32.totalorder %s21, 1
      %p156 = por %p154, %p155
      %p158 = scmp.ne.s32.totalorder %s141, %s157
      %p159 = scmp.eq.s32.totalorder %s21, 0
      %p160 = por %p158, %p159
      %p161 = scmp.le.s32.totalorder 1, %s15
      %p162 = scmp.lt.s32.totalorder %s15, 3
      %p163 = pnand %p161, %p162
      %p164 = pneg %p163
      // Predicated region
      $region9: #{tpu_custom_call.1} parent=5 // pred_check
        _
      $region10: #{tpu_custom_call.1} parent=5 // pred_check_branch
        %166 = sbr.rel (%p163) target = $region12
      $region11: #{tpu_custom_call.1} parent=5 // pred_region
        %s167 = ssub.s32 %s15, 1
        // Predicated region
        $region13: #{tpu_custom_call.1} parent=11 // pred_check
          %p168 = pneg %p48
        $region14: #{tpu_custom_call.1} parent=11 // pred_check_branch
          %170 = sbr.rel (%p168) target = $region16
        $region15: #{tpu_custom_call.1} parent=11 // pred_region
          %s172 = ssub.s32 128, 128
          %173 = vsyncadd [#allocation3], %s172
          %s174 = sshll.u32 [#allocation2], 4
          %s175 = int_to_ptr.vmem [resolvable:$true] %s174
          %180 = dma.hbm_to_vmem [thread:$0]  %s0, 128, %s175, [#allocation3], 64, 64, 4
        $region16: #{tpu_custom_call.1} parent=11 // pred_fallthru
          _
        // Predicated region
        $region17: #{tpu_custom_call.1} parent=11 // pred_check
          %p181 = pneg %p69
        $region18: #{tpu_custom_call.1} parent=11 // pred_check_branch
          %183 = sbr.rel (%p181) target = $region20
        $region19: #{tpu_custom_call.1} parent=11 // pred_region
          %s185 = ssub.s32 128, 128
          %186 = vsyncadd [#allocation6], %s185
          %s187 = sshll.u32 [#allocation5], 4
          %s188 = int_to_ptr.vmem [resolvable:$true] %s187
          %193 = dma.hbm_to_vmem [thread:$0]  %s1, 128, %s188, [#allocation6], 64, 64, 4
        $region20: #{tpu_custom_call.1} parent=11 // pred_fallthru
          _
      $region12: #{tpu_custom_call.1} parent=5 // pred_fallthru
        _
      %p194 = scmp.lt.s32.totalorder %s15, 2
      // Predicated region
      $region21: #{tpu_custom_call.1} parent=5 // pred_check
        %p195 = pneg %p194
      $region22: #{tpu_custom_call.1} parent=5 // pred_check_branch
        %197 = sbr.rel (%p195) target = $region24
      $region23: #{tpu_custom_call.1} parent=5 // pred_region
        // Predicated region
        $region25: #{tpu_custom_call.1} parent=23 // pred_check
          %p198 = pneg %p91
        $region26: #{tpu_custom_call.1} parent=23 // pred_check_branch
          %200 = sbr.rel (%p198) target = $region28
        $region27: #{tpu_custom_call.1} parent=23 // pred_region
          %s201 = sand.u32 %s15, 1
          %s202 = scalar_lea.sflag [#allocation3], %s201
          %s203 = sand.u32 %s81, 1
          %s204 = smul.addr %s203, 16
          %s205 = scalar_lea.vmem [#allocation7], %s204
          %s207 = ssub.s32 256, 256
          %208 = vsyncadd %s202, %s207
          %s209 = smul.addr %s22, 2
          %s210 = sadd.s32 %s23, %s209
          %s211 = smul.addr %s210, 128
          %s212 = scalar_lea.hbm %s2, %s211
          %s213 = sshll.u32 %s205, 4
          %s214 = int_to_ptr.vmem [resolvable:$true] %s213
          %219 = dma.hbm_to_vmem [thread:$0]  %s212, 256, %s214, %s202, 128, 128, 8
        $region28: #{tpu_custom_call.1} parent=23 // pred_fallthru
          _
        // Predicated region
        $region29: #{tpu_custom_call.1} parent=23 // pred_check
          %p220 = pneg %p119
        $region30: #{tpu_custom_call.1} parent=23 // pred_check_branch
          %222 = sbr.rel (%p220) target = $region32
        $region31: #{tpu_custom_call.1} parent=23 // pred_region
          %s223 = sand.u32 %s15, 1
          %s224 = scalar_lea.sflag [#allocation3], %s223
          %s225 = sand.u32 %s109, 1
          %s226 = smul.addr %s225, 16
          %s227 = scalar_lea.vmem [#allocation8], %s226
          %s229 = ssub.s32 256, 256
          %230 = vsyncadd %s224, %s229
          %s231 = smul.addr %s22, 2
          %s232 = sadd.s32 %s23, %s231
          %s233 = smul.addr %s232, 128
          %s234 = scalar_lea.hbm %s3, %s233
          %s235 = sshll.u32 %s227, 4
          %s236 = int_to_ptr.vmem [resolvable:$true] %s235
          %241 = dma.hbm_to_vmem [thread:$0]  %s234, 256, %s236, %s224, 128, 128, 8
        $region32: #{tpu_custom_call.1} parent=23 // pred_fallthru
          _
      $region24: #{tpu_custom_call.1} parent=5 // pred_fallthru
        _
      %p242 = scmp.le.s32.totalorder 1, %s15
      %p243 = scmp.lt.s32.totalorder %s15, 3
      %p244 = pnand %p242, %p243
      %p245 = pneg %p244
      // Predicated region
      $region33: #{tpu_custom_call.1} parent=5 // pred_check
        _
      $region34: #{tpu_custom_call.1} parent=5 // pred_check_branch
        %247 = sbr.rel (%p244) target = $region36
      $region35: #{tpu_custom_call.1} parent=5 // pred_region
        %s248 = ssub.s32 %s15, 1
        // Predicated region
        $region37: #{tpu_custom_call.1} parent=35 // pred_check
          %p249 = pneg %p48
        $region38: #{tpu_custom_call.1} parent=35 // pred_check_branch
          %251 = sbr.rel (%p249) target = $region40
        $region39: #{tpu_custom_call.1} parent=35 // pred_region
          %252 = dma.done [#allocation3], 128
        $region40: #{tpu_custom_call.1} parent=35 // pred_fallthru
          _
        // Predicated region
        $region41: #{tpu_custom_call.1} parent=35 // pred_check
          %p253 = pneg %p69
        $region42: #{tpu_custom_call.1} parent=35 // pred_check_branch
          %255 = sbr.rel (%p253) target = $region44
        $region43: #{tpu_custom_call.1} parent=35 // pred_region
          %256 = dma.done [#allocation6], 128
        $region44: #{tpu_custom_call.1} parent=35 // pred_fallthru
          _
        %s257 = sand.u32 %s20, 1
        %s258 = scalar_lea.sflag [#allocation3], %s257
        %s259 = sand.u32 %s84, 1
        %s260 = smul.addr %s259, 16
        %s261 = scalar_lea.vmem [#allocation7], %s260
        // Predicated region
        $region45: #{tpu_custom_call.1} parent=35 // pred_check
          %p262 = pneg %p97
        $region46: #{tpu_custom_call.1} parent=35 // pred_check_branch
          %264 = sbr.rel (%p262) target = $region48
        $region47: #{tpu_custom_call.1} parent=35 // pred_region
          %265 = dma.done %s258, 256
        $region48: #{tpu_custom_call.1} parent=35 // pred_fallthru
          _
        %s266 = sand.u32 %s20, 1
        %s267 = scalar_lea.sflag [#allocation3], %s266
        %s268 = sand.u32 %s112, 1
        %s269 = smul.addr %s268, 16
        %s270 = scalar_lea.vmem [#allocation8], %s269
        // Predicated region
        $region49: #{tpu_custom_call.1} parent=35 // pred_check
          %p271 = pneg %p125
        $region50: #{tpu_custom_call.1} parent=35 // pred_check_branch
          %273 = sbr.rel (%p271) target = $region52
        $region51: #{tpu_custom_call.1} parent=35 // pred_region
          %274 = dma.done %s267, 256
        $region52: #{tpu_custom_call.1} parent=35 // pred_fallthru
          _
        %p275 = pneg %p48
        %p276 = pneg %p45
        %p277 = pneg %p69
        %p278 = pneg %p66
        %s279 = sand.u32 %s20, 1
        %s280 = scalar_lea.sflag [#allocation3], %s279
        %s281 = sand.u32 %s84, 1
        %s282 = smul.addr %s281, 16
        %s283 = scalar_lea.vmem [#allocation7], %s282
        %p284 = pneg %p97
        %p285 = pneg %p94
        %s286 = sand.u32 %s20, 1
        %s287 = scalar_lea.sflag [#allocation3], %s286
        %s288 = sand.u32 %s112, 1
        %s289 = smul.addr %s288, 16
        %s290 = scalar_lea.vmem [#allocation8], %s289
        %p291 = pneg %p125
        %p292 = pneg %p122
        %p293 = pneg %p153
        %p294 = pneg %p150
        %s295 = sand.u32 %s140, 1
        %s296 = scalar_lea.sflag [#allocation4], %s295
        %s297 = sand.u32 %s140, 1
        %s298 = smul.addr %s297, 8
        %s299 = scalar_lea.vmem [#allocation9], %s298
        %s300 = sadd.s32 %s24, %s25
        %v302 = vld [vmem:[#allocation2] sm:$0xf]
        %v303 = vld [vmem:[#allocation2 + $0x4] sm:$0xf]
        %v304 = vld [vmem:[#allocation5] sm:$0xf]
        %v305 = vld [vmem:[#allocation5 + $0x4] sm:$0xf]
        %v306 = vld [vmem:[%s261] sm:$0xff]
        %v307 = vld [vmem:[%s261 + $0x8] sm:$0xff]
        %v308 = vld [vmem:[%s270] sm:$0xff]
        %v309 = vld [vmem:[%s270 + $0x8] sm:$0xff]
        %v310 = vsub.f32 %v306, %v308
        %v311 = vsub.f32 %v307, %v309
        %v312 = vpack.c.bf16 %v311, %v310
        %v315 = vunpack.c.l.b16 %v302
        %v316 = vunpack.c.l.b16 %v303
        %v317 = vpack.c.b16 %v316, %v315
        %vm318 = vcmask 130048
        %v320 = vsel %vm318, %v317, 0
        %322 = vmatprep.subr.bf16.mxu0 0
        %323 = vmatpush1.bf16.msra.mxu0 %v312
        %324 = vmatprep.subr.bf16.mxu0 0
        %325 = vmatpush1.bf16.msra.mxu0 0
        %326 = vmatprep.subr.bf16.mxu0 0
        %327 = vmatpush1.bf16.msra.mxu0 0
        %328 = vmatprep.subr.bf16.mxu0 0
        %329 = vmatpush1.bf16.msra.mxu0 0
        %330 = vmatprep.subr.bf16.mxu0 0
        %331 = vmatpush1.bf16.msra.mxu0 0
        %332 = vmatprep.subr.bf16.mxu0 0
        %333 = vmatpush1.bf16.msra.mxu0 0
        %334 = vmatprep.subr.bf16.mxu0 0
        %335 = vmatpush1.bf16.msra.mxu0 0
        %336 = vmatprep.subr.bf16.mxu0 0
        %337 = vmatpush1.bf16.msra.mxu0 0
        %338 = vmatprep.subr.bf16.mxu0 0
        %339 = vmatpush1.bf16.msra.mxu0 0
        %340 = vmatprep.subr.bf16.mxu0 0
        %341 = vmatpush1.bf16.msra.mxu0 0
        %342 = vmatprep.subr.bf16.mxu0 0
        %343 = vmatpush1.bf16.msra.mxu0 0
        %344 = vmatprep.subr.bf16.mxu0 0
        %345 = vmatpush1.bf16.msra.mxu0 0
        %346 = vmatprep.subr.bf16.mxu0 0
        %347 = vmatpush1.bf16.msra.mxu0 0
        %348 = vmatprep.subr.bf16.mxu0 0
        %349 = vmatpush1.bf16.msra.mxu0 0
        %350 = vmatprep.subr.bf16.mxu0 0
        %351 = vmatpush1.bf16.msra.mxu0 0
        %352 = vmatprep.subr.bf16.mxu0 0
        %353 = vmatpush1.bf16.msra.mxu0 0
        %354 = vmatprep.mubr.bf16.mxu0 0
        %355 = vmatmul.mubr.bf16.gmra.mrb[0].mxu0 %v320
        %v356 = vpop.f32.mrb[0].mxu0
        %v357 = vadd.f32 0.0, %v356
        %v358 = vpop.f32.mrb[0].mxu0
        %v359 = vpop.f32.mrb[0].mxu0
        %v360 = vadd.f32 0.0, %v359
        %v361 = vpop.f32.mrb[0].mxu0
        %362 = vdwg.mxu0
        %v363 = vpack.c.bf16 %v360, %v357
        %v366 = vunpack.c.l.b16 %v304
        %v367 = vunpack.c.l.b16 %v305
        %v368 = vpack.c.b16 %v367, %v366
        %v371 = vsel %vm318, %v363, 0
        %373 = vmatprep.subr.bf16.mxu0 0
        %374 = vmatpush1.bf16.msra.mxu0 %v368
        %375 = vmatprep.subr.bf16.mxu0 0
        %376 = vmatpush1.bf16.msra.mxu0 0
        %377 = vmatprep.subr.bf16.mxu0 0
        %378 = vmatpush1.bf16.msra.mxu0 0
        %379 = vmatprep.subr.bf16.mxu0 0
        %380 = vmatpush1.bf16.msra.mxu0 0
        %381 = vmatprep.subr.bf16.mxu0 0
        %382 = vmatpush1.bf16.msra.mxu0 0
        %383 = vmatprep.subr.bf16.mxu0 0
        %384 = vmatpush1.bf16.msra.mxu0 0
        %385 = vmatprep.subr.bf16.mxu0 0
        %386 = vmatpush1.bf16.msra.mxu0 0
        %387 = vmatprep.subr.bf16.mxu0 0
        %388 = vmatpush1.bf16.msra.mxu0 0
        %389 = vmatprep.subr.bf16.mxu0 0
        %390 = vmatpush1.bf16.msra.mxu0 0
        %391 = vmatprep.subr.bf16.mxu0 0
        %392 = vmatpush1.bf16.msra.mxu0 0
        %393 = vmatprep.subr.bf16.mxu0 0
        %394 = vmatpush1.bf16.msra.mxu0 0
        %395 = vmatprep.subr.bf16.mxu0 0
        %396 = vmatpush1.bf16.msra.mxu0 0
        %397 = vmatprep.subr.bf16.mxu0 0
        %398 = vmatpush1.bf16.msra.mxu0 0
        %399 = vmatprep.subr.bf16.mxu0 0
        %400 = vmatpush1.bf16.msra.mxu0 0
        %401 = vmatprep.subr.bf16.mxu0 0
        %402 = vmatpush1.bf16.msra.mxu0 0
        %403 = vmatprep.subr.bf16.mxu0 0
        %404 = vmatpush1.bf16.msra.mxu0 0
        %405 = vmatprep.mubr.bf16.mxu0 0
        %406 = vmatmul.mubr.bf16.gmra.mrb[0].mxu0 %v371
        %v407 = vpop.f32.mrb[0].mxu0
        %v408 = vadd.f32 0.0, %v407
        %v409 = vpop.f32.mrb[0].mxu0
        %v410 = vpop.f32.mrb[0].mxu0
        %v411 = vadd.f32 0.0, %v410
        %v412 = vpop.f32.mrb[0].mxu0
        %413 = vdwg.mxu0
        %v414 = vand.u32 2147483647, %v408
        %v415 = vand.u32 2147483647, %v411
        %v416 = vsel %vm318, %v414, 0.0
        %v417 = vsel %vm318, %v415, 0.0
        %v418 = vadd.f32 %v416, %v417
        %v419 = vrot.slane %v418, 4
        %v420 = vadd.f32 %v418, %v419
        %v421 = vrot.slane %v420, 2
        %v422 = vadd.f32 %v420, %v421
        %v423 = vrot.slane %v422, 1
        %v424 = vadd.f32 %v422, %v423
        %v425 = vadd.f32 %v424, 0.0
        %vm426 = vcmask 122880
        %v427 = vsel %vm426, %v425, 0.0
        %428 = vadd.xlane.f32.xlu0 %v427
        %v429 = vpop.xlane.xlu0 %428
        %v430 = vrot.slane %v429, 4
        %v431 = vadd.f32 %v429, %v430
        %v432 = vrot.slane %v431, 2
        %v433 = vadd.f32 %v431, %v432
        %v434 = vrot.slane %v433, 1
        %v435 = vadd.f32 %v433, %v434
        %s436 = vtos %v435
        %v437 = vstv %s436
        %438 = vst [vmem:[%s299] sm:$0xff] %v437
        %s439 = sand.u32 %s140, 1
        %s440 = scalar_lea.sflag [#allocation4], %s439
        %s441 = sand.u32 %s140, 1
        %s442 = smul.addr %s441, 8
        %s443 = scalar_lea.vmem [#allocation9], %s442
        // Predicated region
        $region53: #{tpu_custom_call.1} parent=35 // pred_check
          %p444 = pneg %p150
        $region54: #{tpu_custom_call.1} parent=35 // pred_check_branch
          %446 = sbr.rel (%p444) target = $region56
        $region55: #{tpu_custom_call.1} parent=35 // pred_region
          %s447 = sadd.s32 %s24, %s25
          %s449 = ssub.s32 128, 128
          %450 = vsyncadd %s440, %s449
          %s451 = smul.addr %s447, 128
          %s452 = scalar_lea.hbm %s4, %s451
          %s454 = sshll.u32 %s443, 4
          %s455 = int_to_ptr.vmem [resolvable:$true] %s454
          %457 = dma.vmem_to_hbm [thread:$0]  %s455, 128, %s452, %s440
        $region56: #{tpu_custom_call.1} parent=35 // pred_fallthru
          _
      $region36: #{tpu_custom_call.1} parent=5 // pred_fallthru
        _
      %p458 = scmp.le.s32.totalorder 2, %s15
      // Predicated region
      $region57: #{tpu_custom_call.1} parent=5 // pred_check
        %p459 = pneg %p458
      $region58: #{tpu_custom_call.1} parent=5 // pred_check_branch
        %461 = sbr.rel (%p459) target = $region60
      $region59: #{tpu_custom_call.1} parent=5 // pred_region
        %s462 = ssub.s32 %s15, 2
        // Predicated region
        $region61: #{tpu_custom_call.1} parent=59 // pred_check
          %p463 = pneg %p156
        $region62: #{tpu_custom_call.1} parent=59 // pred_check_branch
          %465 = sbr.rel (%p463) target = $region64
        $region63: #{tpu_custom_call.1} parent=59 // pred_region
          %s466 = sand.u32 %s141, 1
          %s467 = scalar_lea.sflag [#allocation4], %s466
          %s468 = sand.u32 %s141, 1
          %s469 = smul.addr %s468, 8
          %s470 = scalar_lea.vmem [#allocation9], %s469
          %471 = dma.done %s467, 128
        $region64: #{tpu_custom_call.1} parent=59 // pred_fallthru
          _
      $region60: #{tpu_custom_call.1} parent=5 // pred_fallthru
        _
    $region6: #{tpu_custom_call.1} parent=1 // loop_footer
      %s19 = sadd.s32 1, %s15
    $region7: #{tpu_custom_call.1} parent=1 // loop_footer_branch
      %14 = sbr.rel target = $region3
    $region8: #{tpu_custom_call.1} parent=1 // loop_exit
      _
    %472 = vsyncpa [#allocation3], 1
    %s473 = scalar_lea.sflag [#allocation3], 1
    %474 = vsyncpa %s473, 1
    %475 = vsyncpa [#allocation6], 1
    %476 = vsyncpa [#allocation4], 1
    %s477 = scalar_lea.sflag [#allocation4], 1
    %478 = vsyncpa %s477, 1

</llo_original>
